<compile_context>
chip_gen: v5e
topology: v5e:2x2
jax: 0.10.0
libtpu: 0.0.40
codegen_flags: <defaults>
</compile_context>

<pallas_src>
import functools
import math

import jax
import jax.numpy as jnp
from jax.experimental import pallas as pl
from jax.experimental.pallas import tpu as pltpu

_LANE = 128
_TARGET_BLOCK_BYTES = 4 * 1024 * 1024   # per-step input block target (>> 0.35 us step overhead)
_MIN_GRID_STEPS = 4                      # keep >= ~4 steps so the DMA pipeline actually overlaps
_MAX_PACK_WIDTH = 4096                   # cap on lcm(d_model, 128) for the lane-packing path


def _round_up(x, m):
    return ((x + m - 1) // m) * m


def _sublane_multiple(dtype):
    itemsize = jnp.dtype(dtype).itemsize
    return max(8, 32 // max(1, itemsize))   # f32 -> 8, bf16 -> 16, int8/fp8 -> 32


def _vmem_config():
    """(vmem_limit_bytes, working_set_budget_bytes), generation-aware with a safe fallback."""
    cap = None
    try:
        cap = getattr(pltpu.get_tpu_info(), "vmem_capacity_bytes", None)
    except Exception:
        cap = None
    if not cap:
        cap = 64 * 1024 * 1024            # conservative: v7x per-TensorCore VMEM
    limit = (int(cap) * 3) // 4           # leave headroom for compiler-internal scratch
    budget = limit // 2                   # target for the double-buffered in/out working set
    return limit, budget


def _pick_tile_rows(n_rows, width, dtype, budget_bytes):
    """Row-tile sized to the VMEM budget, capped by a per-block byte target, >= ~4 grid steps."""
    itemsize = jnp.dtype(dtype).itemsize
    sublane = _sublane_multiple(dtype)
    # 2x double-buffered input + 2x double-buffered output + ~4 f32 temporaries per row.
    bytes_per_row = width * (4 * itemsize + 4 * 4)
    cap_budget = (budget_bytes // bytes_per_row) // sublane * sublane
    cap_block = (_TARGET_BLOCK_BYTES // (width * itemsize)) // sublane * sublane
    tile = max(sublane, min(cap_budget, cap_block))
    # Keep at least ~_MIN_GRID_STEPS grid steps so the next input DMA overlaps the
    # previous output writeback.
    tile = min(tile, max(sublane, _round_up(pl.cdiv(n_rows, _MIN_GRID_STEPS), sublane)))
    if tile >= n_rows:
        tile = n_rows            # single full-extent block (any size allowed when == full dim)
    return tile


def _layernorm_rows_kernel(x_ref, w_ref, b_ref, o_ref, *, eps, inv_d):
    # x_ref: (tile_rows, d_model); normalize along the lane (last) axis.
    x = x_ref[...].astype(jnp.float32)
    mean = jnp.sum(x, axis=-1, keepdims=True) * inv_d
    xc = x - mean
    var = jnp.sum(xc * xc, axis=-1, keepdims=True) * inv_d   # unbiased=False
    inv_std = jax.lax.rsqrt(var + eps)
    o_ref[...] = ((xc * inv_std) * w_ref[...].astype(jnp.float32)
                  + b_ref[...].astype(jnp.float32)).astype(o_ref.dtype)


def _layernorm_packed_kernel(x_ref, w_ref, b_ref, s_ref, st_ref, o_ref, *, eps):
    # x_ref: (tile_rows, k*d) -- k independent LayerNorm groups packed per lane-dense row.
    # s_ref:  (k*d, k) block-diagonal with entries 1/d  -> x @ s gives per-group means directly.
    # st_ref: (k, k*d) block-diagonal with entries 1    -> broadcasts (T,k) stats back to (T,k*d).
    x = x_ref[...].astype(jnp.float32)
    s = s_ref[...]
    st = st_ref[...]
    mean = jnp.dot(x, s, preferred_element_type=jnp.float32)            # (T, k)
    xc = x - jnp.dot(mean, st, preferred_element_type=jnp.float32)      # (T, k*d)
    var = jnp.dot(xc * xc, s, preferred_element_type=jnp.float32)       # (T, k)
    inv_std = jax.lax.rsqrt(var + eps)
    y = xc * jnp.dot(inv_std, st, preferred_element_type=jnp.float32)
    o_ref[...] = (y * w_ref[...].astype(jnp.float32)
                  + b_ref[...].astype(jnp.float32)).astype(o_ref.dtype)


def layer_norm(x, w, b, *, eps=1e-5, tile_rows=None):
    """x: (..., d_model); w, b: (d_model,). Returns same shape/dtype as x."""
    orig_shape = x.shape
    d_model = orig_shape[-1]
    rows = 1
    for s in orig_shape[:-1]:
        rows *= s
    dtype = x.dtype
    x2 = x.reshape(rows, d_model)

    vmem_limit, vmem_budget = _vmem_config()

    # Lane-dense packing: pack k = lcm(d_model, 128) / d_model rows per kernel row so
    # every vector load/store is full lane width (unmasked vst) for small / odd d_model.
    pack = False
    k = 1
    packed_width = d_model
    if d_model % _LANE != 0:
        packed_width = d_model * _LANE // math.gcd(d_model, _LANE)   # lcm(d_model, 128)
        if packed_width <= _MAX_PACK_WIDTH:
            pack = True
            k = packed_width // d_model

    if pack:
        width = packed_width
        padded = rows
        if rows % k != 0:
            # Tiny k-alignment pad; only hit when rows isn't a multiple of k.  Padded rows
            # are independent garbage and are sliced off below.
            padded = _round_up(rows, k)
            x2 = jnp.pad(x2, ((0, padded - rows), (0, 0)))
        n_rows = padded // k
        xp = x2.reshape(n_rows, width)                               # contiguous reshape: free
        w2 = jnp.tile(w.reshape(1, d_model), (1, k))                 # (1, k*d)
        b2 = jnp.tile(b.reshape(1, d_model), (1, k))
        st = jnp.repeat(jnp.eye(k, dtype=jnp.float32), d_model, axis=1)   # (k, k*d), ones
        s_mat = st.T * jnp.float32(1.0 / d_model)                         # (k*d, k), 1/d folded in
    else:
        width = d_model
        n_rows = rows
        xp = x2
        w2 = w.reshape(1, d_model)
        b2 = b.reshape(1, d_model)

    if tile_rows is None:
        tile_rows = _pick_tile_rows(n_rows, width, dtype, vmem_budget)
    else:
        sublane = _sublane_multiple(dtype)
        tile_rows = max(sublane, _round_up(tile_rows, sublane))
        if tile_rows >= n_rows:
            tile_rows = n_rows

    # Ragged last block: OOB reads are padded, OOB writes are dropped.  Safe because
    # rows are fully independent (no cross-row statistics).
    grid = (pl.cdiv(n_rows, tile_rows),)

    row_spec = pl.BlockSpec((tile_rows, width), lambda i: (i, 0))
    const_spec = pl.BlockSpec((1, width), lambda i: (0, 0))

    if pack:
        kernel = functools.partial(_layernorm_packed_kernel, eps=eps)
        in_specs = [
            row_spec,
            const_spec,
            const_spec,
            pl.BlockSpec((width, k), lambda i: (0, 0)),
            pl.BlockSpec((k, width), lambda i: (0, 0)),
        ]
        args = (xp, w2, b2, s_mat, st)
    else:
        kernel = functools.partial(_layernorm_rows_kernel, eps=eps, inv_d=1.0 / d_model)
        in_specs = [row_spec, const_spec, const_spec]
        args = (xp, w2, b2)

    out = pl.pallas_call(
        kernel,
        out_shape=jax.ShapeDtypeStruct((n_rows, width), dtype),
        grid_spec=pltpu.PrefetchScalarGridSpec(
            num_scalar_prefetch=0,
            grid=grid,
            in_specs=in_specs,
            out_specs=row_spec,
        ),
        compiler_params=pltpu.CompilerParams(
            dimension_semantics=("parallel",),
            vmem_limit_bytes=vmem_limit,
        ),
    )(*args)

    if pack:
        out = out.reshape(n_rows * k, d_model)
        if n_rows * k != rows:
            out = out[:rows]
    return out.reshape(orig_shape)


def _ref_layernorm(x, w, b, eps):
    mean = jnp.mean(x, axis=-1, keepdims=True)
    var = jnp.var(x, axis=-1, keepdims=True)          # biased (unbiased=False)
    return (x - mean) / jnp.sqrt(var + eps) * w + b


if __name__ == "__main__":
    # Config-implied small shapes: d_model=32, eps=1e-5
    batch, seq, d_model = 2, 8, 32
    eps = 1e-5

    key = jax.random.PRNGKey(0)
    x = jax.random.normal(key, (batch, seq, d_model), dtype=jnp.float32)

    # nn.Parameter(torch.ones / torch.zeros)
    w = jnp.ones((d_model,), dtype=jnp.float32)
    b = jnp.zeros((d_model,), dtype=jnp.float32)

    out = jax.block_until_ready(layer_norm(x, w, b, eps=eps))
    ref = _ref_layernorm(x, w, b, eps)
    assert jnp.allclose(out, ref, atol=1e-5, rtol=1e-5), "mismatch vs reference"

    # Ragged row count exercises the cdiv-grid / clipped boundary block path.
    x2 = jax.random.normal(jax.random.PRNGKey(1), (3, 37, d_model), dtype=jnp.float32)
    out2 = jax.block_until_ready(layer_norm(x2, w, b, eps=eps))
    assert jnp.allclose(out2, _ref_layernorm(x2, w, b, eps), atol=1e-5, rtol=1e-5), \
        "mismatch (ragged) vs reference"

    # Non-divisor d_model (generalized lcm lane-packing path): d=96 -> width=384, k=4.
    d3 = 96
    x3 = jax.random.normal(jax.random.PRNGKey(2), (2, 11, d3), dtype=jnp.float32)
    w3 = jax.random.normal(jax.random.PRNGKey(3), (d3,), dtype=jnp.float32)
    b3 = jax.random.normal(jax.random.PRNGKey(4), (d3,), dtype=jnp.float32)
    out3 = jax.block_until_ready(layer_norm(x3, w3, b3, eps=eps))
    assert jnp.allclose(out3, _ref_layernorm(x3, w3, b3, eps), atol=1e-4, rtol=1e-4), \
        "mismatch (d_model=96) vs reference"

    # Multiple-of-128 d_model exercises the unpacked lane-dense path.
    d4 = 256
    x4 = jax.random.normal(jax.random.PRNGKey(5), (4, 9, d4), dtype=jnp.float32)
    w4 = jnp.ones((d4,), dtype=jnp.float32)
    b4 = jnp.zeros((d4,), dtype=jnp.float32)
    out4 = jax.block_until_ready(layer_norm(x4, w4, b4, eps=eps))
    assert jnp.allclose(out4, _ref_layernorm(x4, w4, b4, eps), atol=1e-5, rtol=1e-5), \
        "mismatch (d_model=256) vs reference"

    print("KERNEL_OK")
</pallas_src>

<mosaic_0001>
module attributes {stable_mosaic.version = 11 : i64} {
  func.func @_layernorm_packed_kernel(%arg0: i32, %arg1: memref<4x128xf32, #tpu.memory_space<vmem>>, %arg2: memref<1x128xf32, #tpu.memory_space<vmem>>, %arg3: memref<1x128xf32, #tpu.memory_space<vmem>>, %arg4: memref<128x4xf32, #tpu.memory_space<vmem>>, %arg5: memref<4x128xf32, #tpu.memory_space<vmem>>, %arg6: memref<4x128xf32, #tpu.memory_space<vmem>>) attributes {dimension_semantics = [#tpu.dimension_semantics<parallel>], iteration_bounds = array<i64: 1>, scalar_prefetch = 0 : i64, scratch_operands = 0 : i64, tpu.core_type = #tpu.core_type<tc>, window_params = [{transform_indices = @transform_0, window_bounds = array<i64: 4, 128>}, {pipeline_mode = #tpu.pipeline_mode<synchronous>, transform_indices = @transform_1, window_bounds = array<i64: 1, 128>}, {pipeline_mode = #tpu.pipeline_mode<synchronous>, transform_indices = @transform_2, window_bounds = array<i64: 1, 128>}, {pipeline_mode = #tpu.pipeline_mode<synchronous>, transform_indices = @transform_3, window_bounds = array<i64: 128, 4>}, {pipeline_mode = #tpu.pipeline_mode<synchronous>, transform_indices = @transform_4, window_bounds = array<i64: 4, 128>}, {transform_indices = @transform_5, window_bounds = array<i64: 4, 128>}]} {
    %c0 = arith.constant 0 : index
    %c0_0 = arith.constant 0 : index
    %0 = vector.load %arg1[%c0, %c0_0] : memref<4x128xf32, #tpu.memory_space<vmem>>, vector<4x128xf32>
    %c0_1 = arith.constant 0 : index
    %c0_2 = arith.constant 0 : index
    %1 = vector.load %arg4[%c0_1, %c0_2] : memref<128x4xf32, #tpu.memory_space<vmem>>, vector<128x4xf32>
    %c0_3 = arith.constant 0 : index
    %c0_4 = arith.constant 0 : index
    %2 = vector.load %arg5[%c0_3, %c0_4] : memref<4x128xf32, #tpu.memory_space<vmem>>, vector<4x128xf32>
    %cst = arith.constant dense<0.000000e+00> : vector<4x4xf32>
    %3 = tpu.matmul %0, %1, %cst {dimension_numbers = #tpu.dot_dimension_numbers<[1], [0], [0], [1], [0, 0, 1, 1], [], []>} : vector<4x128xf32>, vector<128x4xf32>, vector<4x4xf32> -> vector<4x4xf32>
    %cst_5 = arith.constant dense<0.000000e+00> : vector<4x128xf32>
    %4 = tpu.matmul %3, %2, %cst_5 {dimension_numbers = #tpu.dot_dimension_numbers<[1], [0], [0], [1], [0, 0, 1, 1], [], []>} : vector<4x4xf32>, vector<4x128xf32>, vector<4x128xf32> -> vector<4x128xf32>
    %5 = arith.subf %0, %4 : vector<4x128xf32>
    %6 = arith.mulf %5, %5 : vector<4x128xf32>
    %cst_6 = arith.constant dense<0.000000e+00> : vector<4x4xf32>
    %7 = tpu.matmul %6, %1, %cst_6 {dimension_numbers = #tpu.dot_dimension_numbers<[1], [0], [0], [1], [0, 0, 1, 1], [], []>} : vector<4x128xf32>, vector<128x4xf32>, vector<4x4xf32> -> vector<4x4xf32>
    %cst_7 = arith.constant 9.99999974E-6 : f32
    %8 = vector.broadcast %cst_7 : f32 to vector<4x4xf32>
    %9 = arith.addf %7, %8 : vector<4x4xf32>
    %10 = math.rsqrt %9 : vector<4x4xf32>
    %cst_8 = arith.constant dense<0.000000e+00> : vector<4x128xf32>
    %11 = tpu.matmul %10, %2, %cst_8 {dimension_numbers = #tpu.dot_dimension_numbers<[1], [0], [0], [1], [0, 0, 1, 1], [], []>} : vector<4x4xf32>, vector<4x128xf32>, vector<4x128xf32> -> vector<4x128xf32>
    %12 = arith.mulf %5, %11 : vector<4x128xf32>
    %c0_9 = arith.constant 0 : index
    %c0_10 = arith.constant 0 : index
    %13 = vector.load %arg2[%c0_9, %c0_10] : memref<1x128xf32, #tpu.memory_space<vmem>>, vector<1x128xf32>
    %14 = vector.broadcast %13 : vector<1x128xf32> to vector<4x128xf32>
    %15 = arith.mulf %12, %14 : vector<4x128xf32>
    %c0_11 = arith.constant 0 : index
    %c0_12 = arith.constant 0 : index
    %16 = vector.load %arg3[%c0_11, %c0_12] : memref<1x128xf32, #tpu.memory_space<vmem>>, vector<1x128xf32>
    %17 = vector.broadcast %16 : vector<1x128xf32> to vector<4x128xf32>
    %18 = arith.addf %15, %17 : vector<4x128xf32>
    %c0_13 = arith.constant 0 : index
    %c0_14 = arith.constant 0 : index
    %19 = vector.load %arg6[%c0_13, %c0_14] : memref<4x128xf32, #tpu.memory_space<vmem>>, vector<4x128xf32>
    tpu.vector_store %arg6[%c0_13, %c0_14], %18 {strides = array<i32>} : memref<4x128xf32, #tpu.memory_space<vmem>>, vector<4x128xf32>,
    return
  }
  func.func @transform_0(%arg0: i32) -> (i32, i32) {
    %c0_i32 = arith.constant 0 : i32
    %c0_i32_0 = arith.constant 0 : i32
    return %arg0, %c0_i32 : i32, i32
  }
  func.func @transform_1(%arg0: i32) -> (i32, i32) {
    %c0_i32 = arith.constant 0 : i32
    %c0_i32_0 = arith.constant 0 : i32
    %c0_i32_1 = arith.constant 0 : i32
    return %c0_i32, %c0_i32_0 : i32, i32
  }
  func.func @transform_2(%arg0: i32) -> (i32, i32) {
    %c0_i32 = arith.constant 0 : i32
    %c0_i32_0 = arith.constant 0 : i32
    %c0_i32_1 = arith.constant 0 : i32
    return %c0_i32, %c0_i32_0 : i32, i32
  }
  func.func @transform_3(%arg0: i32) -> (i32, i32) {
    %c0_i32 = arith.constant 0 : i32
    %c0_i32_0 = arith.constant 0 : i32
    %c0_i32_1 = arith.constant 0 : i32
    return %c0_i32, %c0_i32_0 : i32, i32
  }
  func.func @transform_4(%arg0: i32) -> (i32, i32) {
    %c0_i32 = arith.constant 0 : i32
    %c0_i32_0 = arith.constant 0 : i32
    %c0_i32_1 = arith.constant 0 : i32
    return %c0_i32, %c0_i32_0 : i32, i32
  }
  func.func @transform_5(%arg0: i32) -> (i32, i32) {
    %c0_i32 = arith.constant 0 : i32
    %c0_i32_0 = arith.constant 0 : i32
    return %arg0, %c0_i32 : i32, i32
  }
}

</mosaic_0001>

<llo_original>
// kernel: tpu_custom_call.1
$region0: #{tpu_custom_call.1}
  #allocation0 [shape = 'u32[]', space=smem, size = 0x4, offset = 0x4, fixed_abs, tag = 'smem constant byte address 0x4 - core index']
  #allocation1 [shape = 'u32[72,128]{1,0:T(1,128)}', space=vmem, size = 0x9000, scoped, tag = 'internal scratch']
  %s0 = inlined_call_operand.vmem [shape: f32[4,128], index: 0, kind: input, shape index: {}]
  %s1 = inlined_call_operand.vmem [shape: f32[1,128], index: 1, kind: input, shape index: {}]
  %s2 = inlined_call_operand.vmem [shape: f32[1,128], index: 2, kind: input, shape index: {}]
  %s3 = inlined_call_operand.vmem [shape: f32[128,4], index: 3, kind: input, shape index: {}]
  %s4 = inlined_call_operand.vmem [shape: f32[4,128], index: 4, kind: input, shape index: {}]
  %s5 = inlined_call_operand.hbm [shape: f32[4,128], index: 5, kind: output, shape index: {}]
  %s6 = sld [smem:[#allocation0]]
  $region30: #{tpu_custom_call.1} parent=0
    _
  %s8 = ssub.s32 1, %s6
  %s9 = scalar_select 0, %s8, %s6
  $region1: #{tpu_custom_call.1} parent=0
    #allocation2 [shape = 'u8[2048]{0}', space=vmem, size = 0x800, scoped, tag = 'output window, operand 0, single buffered']
    #allocation3 [shape = 's32[1]{0}', space=sflag, size = 0x4, scoped, tag = 'scoped memory for tpu_custom_call.1']
    %10 = vsyncpa [#allocation3], 0
    // Predicated region
    $region2: #{tpu_custom_call.1} parent=1 // pred_check
      _
    $region3: #{tpu_custom_call.1} parent=1 // pred_check_branch
      %12 = sbr.rel (0) target = $region5
    $region4: #{tpu_custom_call.1} parent=1 // pred_region
      _
    $region5: #{tpu_custom_call.1} parent=1 // pred_fallthru
      _
    // Predicated region
    $region6: #{tpu_custom_call.1} parent=1 // pred_check
      _
    $region7: #{tpu_custom_call.1} parent=1 // pred_check_branch
      %14 = sbr.rel (0) target = $region9
    $region8: #{tpu_custom_call.1} parent=1 // pred_region
      _
    $region9: #{tpu_custom_call.1} parent=1 // pred_fallthru
      _
    // Predicated region
    $region10: #{tpu_custom_call.1} parent=1 // pred_check
      _
    $region11: #{tpu_custom_call.1} parent=1 // pred_check_branch
      %16 = sbr.rel (0) target = $region13
    $region12: #{tpu_custom_call.1} parent=1 // pred_region
      _
    $region13: #{tpu_custom_call.1} parent=1 // pred_fallthru
      _
    // Predicated region
    $region14: #{tpu_custom_call.1} parent=1 // pred_check
      _
    $region15: #{tpu_custom_call.1} parent=1 // pred_check_branch
      %18 = sbr.rel (0) target = $region17
    $region16: #{tpu_custom_call.1} parent=1 // pred_region
      _
    $region17: #{tpu_custom_call.1} parent=1 // pred_fallthru
      _
    // Predicated region
    $region18: #{tpu_custom_call.1} parent=1 // pred_check
      _
    $region19: #{tpu_custom_call.1} parent=1 // pred_check_branch
      %20 = sbr.rel (0) target = $region21
    $region20: #{tpu_custom_call.1} parent=1 // pred_region
      _
    $region21: #{tpu_custom_call.1} parent=1 // pred_fallthru
      _
    %v21 = vld [vmem:[%s0] sm:$0xf]
    %v22 = vld [vmem:[%s3] sm:$0xff]
    %v23 = vld [vmem:[%s3 + $0x8] sm:$0xff]
    %v24 = vld [vmem:[%s3 + $0x10] sm:$0xff]
    %v25 = vld [vmem:[%s3 + $0x18] sm:$0xff]
    %v26 = vld [vmem:[%s3 + $0x20] sm:$0xff]
    %v27 = vld [vmem:[%s3 + $0x28] sm:$0xff]
    %v28 = vld [vmem:[%s3 + $0x30] sm:$0xff]
    %v29 = vld [vmem:[%s3 + $0x38] sm:$0xff]
    %v30 = vld [vmem:[%s3 + $0x40] sm:$0xff]
    %v31 = vld [vmem:[%s3 + $0x48] sm:$0xff]
    %v32 = vld [vmem:[%s3 + $0x50] sm:$0xff]
    %v33 = vld [vmem:[%s3 + $0x58] sm:$0xff]
    %v34 = vld [vmem:[%s3 + $0x60] sm:$0xff]
    %v35 = vld [vmem:[%s3 + $0x68] sm:$0xff]
    %v36 = vld [vmem:[%s3 + $0x70] sm:$0xff]
    %v37 = vld [vmem:[%s3 + $0x78] sm:$0xff]
    %v38 = vld [vmem:[%s4] sm:$0xf]
    %39 = vmatpush.msra.mxu0 %v37
    %40 = vmatpush.msra.mxu0 %v36
    %41 = vmatpush.msra.mxu0 %v35
    %42 = vmatpush.msra.mxu0 %v34
    %43 = vmatpush.msra.mxu0 %v33
    %44 = vmatpush.msra.mxu0 %v32
    %45 = vmatpush.msra.mxu0 %v31
    %46 = vmatpush.msra.mxu0 %v30
    %47 = vmatpush.msra.mxu0 %v29
    %48 = vmatpush.msra.mxu0 %v28
    %49 = vmatpush.msra.mxu0 %v27
    %50 = vmatpush.msra.mxu0 %v26
    %51 = vmatpush.msra.mxu0 %v25
    %52 = vmatpush.msra.mxu0 %v24
    %53 = vmatpush.msra.mxu0 %v23
    %54 = vmatpush.msra.mxu0 %v22
    %55 = vmatmul.f32.gmra.mxu0 %v21
    %v56 = vpop.f32.mrf.mxu0
    %v57 = vadd.f32 0.0, %v56
    %58 = vdwg.mxu0
    %vm59 = vcmask 31744
    %v61 = vsel %vm59, %v57, 0
    %vm63 = vcmask 1043456
    %v65 = vsel %vm63, %v38, 0
    %67 = vmatpush.msra.mxu0 0.0
    %68 = vmatpush.msra.mxu0 0.0
    %69 = vmatpush.msra.mxu0 0.0
    %70 = vmatpush.msra.mxu0 0.0
    %71 = vmatpush.msra.mxu0 0.0
    %72 = vmatpush.msra.mxu0 0.0
    %73 = vmatpush.msra.mxu0 0.0
    %74 = vmatpush.msra.mxu0 0.0
    %75 = vmatpush.msra.mxu0 0.0
    %76 = vmatpush.msra.mxu0 0.0
    %77 = vmatpush.msra.mxu0 0.0
    %78 = vmatpush.msra.mxu0 0.0
    %79 = vmatpush.msra.mxu0 0.0
    %80 = vmatpush.msra.mxu0 0.0
    %81 = vmatpush.msra.mxu0 0.0
    %82 = vmatpush.msra.mxu0 %v65
    %83 = vmatmul.f32.gmra.mxu0 %v61
    %v84 = vpop.f32.mrf.mxu0
    %v85 = vadd.f32 0.0, %v84
    %86 = vdwg.mxu0
    %v87 = vsub.f32 %v21, %v85
    %v88 = vmul.f32 %v87, %v87
    %89 = vmatpush.msra.mxu0 %v37
    %90 = vmatpush.msra.mxu0 %v36
    %91 = vmatpush.msra.mxu0 %v35
    %92 = vmatpush.msra.mxu0 %v34
    %93 = vmatpush.msra.mxu0 %v33
    %94 = vmatpush.msra.mxu0 %v32
    %95 = vmatpush.msra.mxu0 %v31
    %96 = vmatpush.msra.mxu0 %v30
    %97 = vmatpush.msra.mxu0 %v29
    %98 = vmatpush.msra.mxu0 %v28
    %99 = vmatpush.msra.mxu0 %v27
    %100 = vmatpush.msra.mxu0 %v26
    %101 = vmatpush.msra.mxu0 %v25
    %102 = vmatpush.msra.mxu0 %v24
    %103 = vmatpush.msra.mxu0 %v23
    %104 = vmatpush.msra.mxu0 %v22
    %105 = vmatmul.f32.gmra.mxu0 %v88
    %v106 = vpop.f32.mrf.mxu0
    %v107 = vadd.f32 1e-05, %v106
    %108 = vdwg.mxu0
    %v109 = vrsqrt.pop %v107
    %v110 = vmul.f32 %v109, %v107
    %v111 = vmul.f32 %v110, %v109
    %v112 = vmul.f32 0.5, %v111
    %v113 = vsub.f32 1.5, %v112
    %v114 = vmul.f32 %v109, %v113
    %vm115 = vweird.f32 %v107
    %vm116 = vweird.f32 %v109
    %vm117 = vmor %vm115, %vm116
    %v118 = vsel %vm117, %v109, %v114
    %v120 = vsel %vm59, %v118, 0
    %122 = vmatpush.msra.mxu0 0.0
    %123 = vmatpush.msra.mxu0 0.0
    %124 = vmatpush.msra.mxu0 0.0
    %125 = vmatpush.msra.mxu0 0.0
    %126 = vmatpush.msra.mxu0 0.0
    %127 = vmatpush.msra.mxu0 0.0
    %128 = vmatpush.msra.mxu0 0.0
    %129 = vmatpush.msra.mxu0 0.0
    %130 = vmatpush.msra.mxu0 0.0
    %131 = vmatpush.msra.mxu0 0.0
    %132 = vmatpush.msra.mxu0 0.0
    %133 = vmatpush.msra.mxu0 0.0
    %134 = vmatpush.msra.mxu0 0.0
    %135 = vmatpush.msra.mxu0 0.0
    %136 = vmatpush.msra.mxu0 0.0
    %137 = vmatpush.msra.mxu0 %v65
    %138 = vmatmul.f32.gmra.mxu0 %v120
    %v139 = vpop.f32.mrf.mxu0
    %v140 = vadd.f32 0.0, %v139
    %141 = vdwg.mxu0
    %v142 = vmul.f32 %v87, %v140
    %v143 = vld [vmem:[%s1] sm:$0x1]
    %v145 = vperm.slane %v143, 0
    %v147 = vmul.f32 %v142, %v145
    %v148 = vld [vmem:[%s2] sm:$0x1]
    %v150 = vperm.slane %v148, 0
    %v152 = vadd.f32 %v147, %v150
    %153 = vst [vmem:[#allocation2] sm:$0xf] %v152
    // Predicated region
    $region22: #{tpu_custom_call.1} parent=1 // pred_check
      _
    $region23: #{tpu_custom_call.1} parent=1 // pred_check_branch
      %155 = sbr.rel (0) target = $region25
    $region24: #{tpu_custom_call.1} parent=1 // pred_region
      %157 = vsyncadd [#allocation3], 0
      %s159 = sshll.u32 [#allocation2], 4
      %s160 = int_to_ptr.vmem [resolvable:$true] %s159
      %s161 = sshll.u32 %s5, 4
      %s162 = int_to_ptr.hbm [resolvable:$true] %s161
      %164 = dma.vmem_to_hbm [thread:$0]  %s160, 64, %s162, [#allocation3]
    $region25: #{tpu_custom_call.1} parent=1 // pred_fallthru
      _
    // Predicated region
    $region26: #{tpu_custom_call.1} parent=1 // pred_check
      _
    $region27: #{tpu_custom_call.1} parent=1 // pred_check_branch
      %166 = sbr.rel (0) target = $region29
    $region28: #{tpu_custom_call.1} parent=1 // pred_region
      %168 = dma.done [#allocation3], 64
    $region29: #{tpu_custom_call.1} parent=1 // pred_fallthru
      _
    %169 = vsyncpa [#allocation3], 1

</llo_original>
